<compile_context>
chip_gen: v7x
topology: tpu7x:2x2x1
jax: 0.10.0
libtpu: 0.0.40
codegen_flags: <defaults>
</compile_context>

<pallas_src>
import jax
import jax.numpy as jnp
from jax.experimental import pallas as pl
from jax.experimental.pallas import tpu as pltpu


def _coupler_kernel(ratio_ref, in1_ref, in2_ref, out1_ref, out2_ref):
    # ratio_ref: scalar-prefetch ref in SMEM holding the learnable splitting_ratio.
    kappa = jnp.clip(ratio_ref[0].astype(jnp.float32), 0.01, 0.99)
    t = jnp.sqrt(1.0 - kappa * kappa)
    k = kappa  # sqrt(kappa**2) == kappa since kappa is clamped to [0.01, 0.99]

    x1 = in1_ref[...]
    x2 = in2_ref[...]
    out1_ref[...] = (t * x1 - k * x2).astype(out1_ref.dtype)
    out2_ref[...] = (k * x1 + t * x2).astype(out2_ref.dtype)


def directional_coupler(input_1, input_2, splitting_ratio, *, lane=1024, block_rows=512):
    """input_1, input_2: [batch, n_wavelengths]. splitting_ratio: shape (1,) float32.

    Note: for tiny inputs (a few hundred elements) the fixed pallas_call cost
    dominates and letting XLA fuse the elementwise math would be faster; the
    Pallas path is kept unconditionally here for the self-contained test.
    """
    assert input_1.shape == input_2.shape
    assert input_1.dtype == input_2.dtype
    B, W = input_1.shape
    dtype = input_1.dtype
    n = B * W

    # Lane-dense repack: flatten and view as (n_rows, lane), lane a multiple of
    # 128.  Pad the flat length so the row grid divides evenly; padded elements
    # compute to 0 and are sliced off afterwards (all outside the kernel).
    n_rows = max(pl.cdiv(n, lane), 1)
    # Either a full (8,128)-aligned tile, or (for small inputs) the whole array.
    tm = block_rows if n_rows >= block_rows else n_rows
    n_rows_pad = pl.cdiv(n_rows, tm) * tm
    n_pad = n_rows_pad * lane

    def repack(x):
        flat = x.reshape(-1)
        if n_pad != n:
            flat = jnp.pad(flat, (0, n_pad - n))
        return flat.reshape(n_rows_pad, lane)

    x1 = repack(input_1)
    x2 = repack(input_2)

    grid = (n_rows_pad // tm,)
    # index_map receives the scalar-prefetch ref as a trailing positional arg.
    tile = pl.BlockSpec((tm, lane), lambda i, ratio_ref: (i, 0))

    out_shape = (
        jax.ShapeDtypeStruct((n_rows_pad, lane), dtype),
        jax.ShapeDtypeStruct((n_rows_pad, lane), dtype),
    )

    o1, o2 = pl.pallas_call(
        _coupler_kernel,
        out_shape=out_shape,
        grid_spec=pltpu.PrefetchScalarGridSpec(
            num_scalar_prefetch=1,          # splitting_ratio -> SMEM
            grid=grid,
            in_specs=[tile, tile],
            out_specs=(tile, tile),
        ),
        compiler_params=pltpu.CompilerParams(
            # Independent row tiles: shard across both v7x TensorCores.
            dimension_semantics=("parallel",),
            # 4 streams x 2 pipeline buffers x 2 MiB blocks ~= 16 MiB resident;
            # raise above v5e's 16 MiB default, stay well under v7x's 64 MiB.
            vmem_limit_bytes=48 * 1024 * 1024,
        ),
    )(splitting_ratio, x1, x2)

    o1 = o1.reshape(-1)[:n].reshape(B, W)
    o2 = o2.reshape(-1)[:n].reshape(B, W)
    return o1, o2


if __name__ == "__main__":
    key = jax.random.PRNGKey(0)
    k1, k2 = jax.random.split(key)

    # Small shapes consistent with the module: [batch, n_wavelengths].
    batch, n_wavelengths = 2, 8
    input_1 = jax.random.normal(k1, (batch, n_wavelengths), dtype=jnp.float32)
    input_2 = jax.random.normal(k2, (batch, n_wavelengths), dtype=jnp.float32)

    # Deterministic parameter init, matching nn.Parameter(torch.tensor([0.5])).
    splitting_ratio = jnp.array([0.5], dtype=jnp.float32)
    # phase_offset (zeros(1)) exists in __init__ but is unused in forward.

    out1, out2 = directional_coupler(input_1, input_2, splitting_ratio)
    jax.block_until_ready((out1, out2))

    # Reference check in plain JAX.
    kappa = jnp.clip(splitting_ratio[0], 0.01, 0.99)
    t = jnp.sqrt(1.0 - kappa * kappa)
    k = jnp.sqrt(kappa * kappa)
    ref1 = t * input_1 - k * input_2
    ref2 = k * input_1 + t * input_2
    assert out1.shape == ref1.shape and out2.shape == ref2.shape
    assert jnp.allclose(out1, ref1, atol=1e-6), "output_1 mismatch"
    assert jnp.allclose(out2, ref2, atol=1e-6), "output_2 mismatch"

    # Larger case exercising the tiled multi-block / double-buffered path.
    kb1, kb2 = jax.random.split(jax.random.PRNGKey(1))
    big1 = jax.random.normal(kb1, (2048, 768), dtype=jnp.float32)
    big2 = jax.random.normal(kb2, (2048, 768), dtype=jnp.float32)
    b1, b2 = directional_coupler(big1, big2, splitting_ratio)
    jax.block_until_ready((b1, b2))
    assert jnp.allclose(b1, t * big1 - k * big2, atol=1e-5), "big output_1 mismatch"
    assert jnp.allclose(b2, k * big1 + t * big2, atol=1e-5), "big output_2 mismatch"

    print("KERNEL_OK")
</pallas_src>

<mosaic_0001>
module attributes {stable_mosaic.version = 11 : i64} {
  func.func @_coupler_kernel(%arg0: i32, %arg1: memref<1xf32, #tpu.memory_space<smem>>, %arg2: memref<1x1024xf32, #tpu.memory_space<vmem>>, %arg3: memref<1x1024xf32, #tpu.memory_space<vmem>>, %arg4: memref<1x1024xf32, #tpu.memory_space<vmem>>, %arg5: memref<1x1024xf32, #tpu.memory_space<vmem>>) attributes {dimension_semantics = [#tpu.dimension_semantics<parallel>], iteration_bounds = array<i64: 1>, scalar_prefetch = 1 : i64, scratch_operands = 0 : i64, tpu.core_type = #tpu.core_type<tc>, window_params = [{transform_indices = @transform_0, window_bounds = array<i64: 1, 1024>}, {transform_indices = @transform_1, window_bounds = array<i64: 1, 1024>}, {transform_indices = @transform_2, window_bounds = array<i64: 1, 1024>}, {transform_indices = @transform_3, window_bounds = array<i64: 1, 1024>}]} {
    %c0 = arith.constant 0 : index
    %0 = memref.load %arg1[%c0] : memref<1xf32, #tpu.memory_space<smem>>
    %cst = arith.constant 0.00999999977 : f32
    %cst_0 = arith.constant 9.900000e-01 : f32
    %1 = arith.maximumf %cst, %0 : f32
    %2 = arith.minimumf %cst_0, %1 : f32
    %3 = arith.mulf %2, %2 : f32
    %cst_1 = arith.constant 1.000000e+00 : f32
    %4 = arith.subf %cst_1, %3 : f32
    %5 = math.sqrt %4 : f32
    %c0_2 = arith.constant 0 : index
    %c0_3 = arith.constant 0 : index
    %6 = vector.load %arg2[%c0_2, %c0_3] : memref<1x1024xf32, #tpu.memory_space<vmem>>, vector<1x1024xf32>
    %c0_4 = arith.constant 0 : index
    %c0_5 = arith.constant 0 : index
    %7 = vector.load %arg3[%c0_4, %c0_5] : memref<1x1024xf32, #tpu.memory_space<vmem>>, vector<1x1024xf32>
    %8 = vector.broadcast %5 : f32 to vector<1x1024xf32>
    %9 = arith.mulf %8, %6 : vector<1x1024xf32>
    %10 = vector.broadcast %2 : f32 to vector<1x1024xf32>
    %11 = arith.mulf %10, %7 : vector<1x1024xf32>
    %12 = arith.subf %9, %11 : vector<1x1024xf32>
    %c0_6 = arith.constant 0 : index
    %c0_7 = arith.constant 0 : index
    %13 = vector.load %arg4[%c0_6, %c0_7] : memref<1x1024xf32, #tpu.memory_space<vmem>>, vector<1x1024xf32>
    tpu.vector_store %arg4[%c0_6, %c0_7], %12 {strides = array<i32>} : memref<1x1024xf32, #tpu.memory_space<vmem>>, vector<1x1024xf32>,
    %14 = vector.broadcast %2 : f32 to vector<1x1024xf32>
    %15 = arith.mulf %14, %6 : vector<1x1024xf32>
    %16 = vector.broadcast %5 : f32 to vector<1x1024xf32>
    %17 = arith.mulf %16, %7 : vector<1x1024xf32>
    %18 = arith.addf %15, %17 : vector<1x1024xf32>
    %c0_8 = arith.constant 0 : index
    %c0_9 = arith.constant 0 : index
    %19 = vector.load %arg5[%c0_8, %c0_9] : memref<1x1024xf32, #tpu.memory_space<vmem>>, vector<1x1024xf32>
    tpu.vector_store %arg5[%c0_8, %c0_9], %18 {strides = array<i32>} : memref<1x1024xf32, #tpu.memory_space<vmem>>, vector<1x1024xf32>,
    return
  }
  func.func @transform_0(%arg0: i32, %arg1: memref<1xf32, #tpu.memory_space<smem>>) -> (i32, i32) {
    %c0_i32 = arith.constant 0 : i32
    %c0_i32_0 = arith.constant 0 : i32
    return %arg0, %c0_i32 : i32, i32
  }
  func.func @transform_1(%arg0: i32, %arg1: memref<1xf32, #tpu.memory_space<smem>>) -> (i32, i32) {
    %c0_i32 = arith.constant 0 : i32
    %c0_i32_0 = arith.constant 0 : i32
    return %arg0, %c0_i32 : i32, i32
  }
  func.func @transform_2(%arg0: i32, %arg1: memref<1xf32, #tpu.memory_space<smem>>) -> (i32, i32) {
    %c0_i32 = arith.constant 0 : i32
    %c0_i32_0 = arith.constant 0 : i32
    return %arg0, %c0_i32 : i32, i32
  }
  func.func @transform_3(%arg0: i32, %arg1: memref<1xf32, #tpu.memory_space<smem>>) -> (i32, i32) {
    %c0_i32 = arith.constant 0 : i32
    %c0_i32_0 = arith.constant 0 : i32
    return %arg0, %c0_i32 : i32, i32
  }
}

</mosaic_0001>

<llo_original>
// kernel: tpu_custom_call.1
$region0: #{tpu_custom_call.1}
  #allocation0 [shape = 'u32[]', space=smem, size = 0x4, offset = 0x4, fixed_abs, tag = 'smem constant byte address 0x4 - core index']
  #allocation1 [shape = 'u32[144,128]{1,0:T(1,128)}', space=vmem, size = 0x12000, scoped, tag = 'internal scratch']
  #allocation2 [shape = 's32[1]{0}', space=sflag, size = 0x4, scoped, tag = 'scoped memory for tpu_custom_call.1']
  #allocation3 [shape = 'f32[1]{0:T(128)S(6)}', space=smem, size = 0x200, scoped, tag = 'prefetched SMEM operand 0']
  %s0 = inlined_call_operand.<no memory space> [shape: f32[1], index: 0, kind: input, shape index: {}]
  %s1 = inlined_call_operand.hbm [shape: f32[1,1024], index: 1, kind: input, shape index: {}]
  %s2 = inlined_call_operand.hbm [shape: f32[1,1024], index: 2, kind: input, shape index: {}]
  %s3 = inlined_call_operand.hbm [shape: f32[1,1024], index: 3, kind: output, shape index: {0}]
  %s4 = inlined_call_operand.hbm [shape: f32[1,1024], index: 4, kind: output, shape index: {1}]
  %5 = xla_tuple %s3, %s4
  %s6 = sld [smem:[#allocation0]]
  $region34: #{tpu_custom_call.1} parent=0
    _
  %s8 = ssub.s32 1, %s6
  %s9 = scalar_select 0, %s8, %s6
  %10 = sst [smem:[#allocation3]] %s0
  $region1: #{tpu_custom_call.1} parent=0
    #allocation4 [shape = 'u8[4096]{0}', space=vmem, size = 0x1000, scoped, tag = 'input window, operand 1, single buffered']
    #allocation5 [shape = 's32[1]{0}', space=sflag, size = 0x4, scoped, tag = 'scoped memory for tpu_custom_call.1']
    #allocation6 [shape = 's32[1]{0}', space=sflag, size = 0x4, scoped, tag = 'scoped memory for tpu_custom_call.1']
    #allocation7 [shape = 'u8[4096]{0}', space=vmem, size = 0x1000, scoped, tag = 'input window, operand 2, single buffered']
    #allocation8 [shape = 's32[1]{0}', space=sflag, size = 0x4, scoped, tag = 'scoped memory for tpu_custom_call.1']
    #allocation9 [shape = 'u8[4096]{0}', space=vmem, size = 0x1000, scoped, tag = 'output window, operand 0, single buffered']
    #allocation10 [shape = 'u8[4096]{0}', space=vmem, size = 0x1000, scoped, tag = 'output window, operand 1, single buffered']
    #allocation11 [shape = 's32[1]{0}', space=sflag, size = 0x4, scoped, tag = 'scoped memory for tpu_custom_call.1']
    %11 = vsyncpa [#allocation5], 0
    %12 = vsyncpa [#allocation8], 0
    %13 = vsyncpa [#allocation6], 0
    %14 = vsyncpa [#allocation11], 0
    // Predicated region
    $region2: #{tpu_custom_call.1} parent=1 // pred_check
      _
    $region3: #{tpu_custom_call.1} parent=1 // pred_check_branch
      %16 = sbr.rel (0) target = $region5
    $region4: #{tpu_custom_call.1} parent=1 // pred_region
      %s18 = ssub.s32 128, 128
      %19 = vsyncadd [#allocation5], %s18
      %s21 = sshll.u32 [#allocation4], 4
      %s22 = int_to_ptr.vmem [resolvable:$true] %s21
      %24 = dma.hbm_to_vmem [thread:$0]  %s1, 128, %s22, [#allocation5]
    $region5: #{tpu_custom_call.1} parent=1 // pred_fallthru
      _
    // Predicated region
    $region6: #{tpu_custom_call.1} parent=1 // pred_check
      _
    $region7: #{tpu_custom_call.1} parent=1 // pred_check_branch
      %26 = sbr.rel (0) target = $region9
    $region8: #{tpu_custom_call.1} parent=1 // pred_region
      %s28 = ssub.s32 128, 128
      %29 = vsyncadd [#allocation8], %s28
      %s31 = sshll.u32 [#allocation7], 4
      %s32 = int_to_ptr.vmem [resolvable:$true] %s31
      %34 = dma.hbm_to_vmem [thread:$0]  %s2, 128, %s32, [#allocation8]
    $region9: #{tpu_custom_call.1} parent=1 // pred_fallthru
      _
    // Predicated region
    $region10: #{tpu_custom_call.1} parent=1 // pred_check
      _
    $region11: #{tpu_custom_call.1} parent=1 // pred_check_branch
      %36 = sbr.rel (0) target = $region13
    $region12: #{tpu_custom_call.1} parent=1 // pred_region
      %37 = dma.done [#allocation5], 128
    $region13: #{tpu_custom_call.1} parent=1 // pred_fallthru
      _
    // Predicated region
    $region14: #{tpu_custom_call.1} parent=1 // pred_check
      _
    $region15: #{tpu_custom_call.1} parent=1 // pred_check_branch
      %39 = sbr.rel (0) target = $region17
    $region16: #{tpu_custom_call.1} parent=1 // pred_region
      %40 = dma.done [#allocation8], 128
    $region17: #{tpu_custom_call.1} parent=1 // pred_fallthru
      _
    %s41 = sld [smem:[#allocation3]]
    %s42 = smax.f32 %s41, 0.01
    %s43 = smin.f32 %s42, 0.99
    %s44 = smul.f32 %s43, %s43
    %s45 = ssub.f32 1.0, %s44
    %v46 = vstv %s45
    %v47 = vrsqrt.pop %v46
    %v48 = vmul.f32 %v46, %v47
    %vm49 = vcmp.eq.f32.partialorder %v46, inf
    %v50 = vsel %vm49, %v46, %v48
    %vm51 = vcmp.eq.f32.partialorder %v46, 0.0
    %v52 = vand.u32 %v46, 2147483648
    %v53 = vsel %vm51, %v52, %v50
    %s54 = vtos %v53
    %v55 = vld [vmem:[#allocation4] sm:$0xff]
    %v56 = vld [vmem:[#allocation7] sm:$0xff]
    %v57 = vstv %s54
    %v58 = vmul.f32 %v57, %v55
    %v59 = vstv %s43
    %v60 = vmul.f32 %v59, %v56
    %v61 = vsub.f32 %v58, %v60
    %62 = vst [vmem:[#allocation9] sm:$0xff] %v61
    %v63 = vmul.f32 %v59, %v55
    %v64 = vmul.f32 %v57, %v56
    %v65 = vadd.f32 %v63, %v64
    %66 = vst [vmem:[#allocation10] sm:$0xff] %v65
    // Predicated region
    $region18: #{tpu_custom_call.1} parent=1 // pred_check
      _
    $region19: #{tpu_custom_call.1} parent=1 // pred_check_branch
      %68 = sbr.rel (0) target = $region21
    $region20: #{tpu_custom_call.1} parent=1 // pred_region
      %s70 = ssub.s32 128, 128
      %71 = vsyncadd [#allocation6], %s70
      %s73 = sshll.u32 [#allocation9], 4
      %s74 = int_to_ptr.vmem [resolvable:$true] %s73
      %76 = dma.vmem_to_hbm [thread:$0]  %s74, 128, %s3, [#allocation6]
    $region21: #{tpu_custom_call.1} parent=1 // pred_fallthru
      _
    // Predicated region
    $region22: #{tpu_custom_call.1} parent=1 // pred_check
      _
    $region23: #{tpu_custom_call.1} parent=1 // pred_check_branch
      %78 = sbr.rel (0) target = $region25
    $region24: #{tpu_custom_call.1} parent=1 // pred_region
      %s80 = ssub.s32 128, 128
      %81 = vsyncadd [#allocation11], %s80
      %s83 = sshll.u32 [#allocation10], 4
      %s84 = int_to_ptr.vmem [resolvable:$true] %s83
      %86 = dma.vmem_to_hbm [thread:$0]  %s84, 128, %s4, [#allocation11]
    $region25: #{tpu_custom_call.1} parent=1 // pred_fallthru
      _
    // Predicated region
    $region26: #{tpu_custom_call.1} parent=1 // pred_check
      _
    $region27: #{tpu_custom_call.1} parent=1 // pred_check_branch
      %88 = sbr.rel (0) target = $region29
    $region28: #{tpu_custom_call.1} parent=1 // pred_region
      %89 = dma.done [#allocation6], 128
    $region29: #{tpu_custom_call.1} parent=1 // pred_fallthru
      _
    // Predicated region
    $region30: #{tpu_custom_call.1} parent=1 // pred_check
      _
    $region31: #{tpu_custom_call.1} parent=1 // pred_check_branch
      %91 = sbr.rel (0) target = $region33
    $region32: #{tpu_custom_call.1} parent=1 // pred_region
      %92 = dma.done [#allocation11], 128
    $region33: #{tpu_custom_call.1} parent=1 // pred_fallthru
      _
    %93 = vsyncpa [#allocation5], 1
    %94 = vsyncpa [#allocation8], 1
    %95 = vsyncpa [#allocation6], 1
    %96 = vsyncpa [#allocation11], 1

</llo_original>
